<compile_context>
chip_gen: v7x
topology: tpu7x:2x2x1
jax: 0.10.0
libtpu: 0.0.40
codegen_flags: <defaults>
</compile_context>

<pallas_src>
import numpy as np
import jax
import jax.numpy as jnp
from jax.experimental import pallas as pl
from jax.experimental.pallas import tpu as pltpu


# -----------------------------------------------------------------------------
# Table precomputation (done once at __init__).
# Matches the PyTorch precompute_freqs_cis: the theta rescaling
#   theta *= (1/scaling_factor) ** (dim / (dim - 2))
# is applied unconditionally, exactly as in the reference module (which also
# ignores scaling_type).  Tables are stored already interleaved over head_dim:
#   cos_i[t, 2k] = cos_i[t, 2k+1] = cos(a_tk)
#   sin_m[t, 2k] = -sin(a_tk),  sin_m[t, 2k+1] = 0
#   sin_p[t, 2k] = 0,           sin_p[t, 2k+1] = +sin(a_tk)
# -----------------------------------------------------------------------------
def precompute_rope_tables(dim: int, max_seq_len: int,
                           theta: float = 10000.0,
                           scaling_factor: float = 1.0):
    if dim % 2 != 0:
        raise ValueError(f"dim ({dim}) must be even")
    theta = theta * (1.0 / scaling_factor) ** (dim / (dim - 2))
    freqs = 1.0 / theta ** (jnp.arange(0, dim, 2, dtype=jnp.float32) / dim)
    t = jnp.arange(max_seq_len, dtype=jnp.float32)
    ang = jnp.outer(t, freqs)                       # [T, dim/2]
    cos = jnp.cos(ang)
    sin = jnp.sin(ang)
    z = jnp.zeros_like(sin)
    cos_i = jnp.repeat(cos, 2, axis=-1)                                  # [T, dim]
    sin_m = jnp.stack([-sin, z], axis=-1).reshape(max_seq_len, dim)      # [T, dim]
    sin_p = jnp.stack([z, sin], axis=-1).reshape(max_seq_len, dim)       # [T, dim]
    return cos_i, sin_m, sin_p


# -----------------------------------------------------------------------------
# Pallas kernel.  Tile shapes: x/out (tS, H*D), tables (tS, H*D).
# -----------------------------------------------------------------------------
def _rope_kernel(x_ref, cos_ref, sinm_ref, sinp_ref, o_ref):
    x = x_ref[...].astype(jnp.float32)              # (tS, HD)
    hd = x.shape[-1]
    x_next = pltpu.roll(x, hd - 1, 1)               # x_next[d] = x[d+1]
    x_prev = pltpu.roll(x, 1, 1)                    # x_prev[d] = x[d-1]
    out = x * cos_ref[...] + x_next * sinm_ref[...] + x_prev * sinp_ref[...]
    o_ref[...] = out.astype(o_ref.dtype)


def _choose_seq_tile(S: int, HD: int, itemsize: int) -> int:
    # Double-buffered working set ~= 2 * tS * HD * (2*itemsize + 3*4) bytes.
    # Keep it comfortably under v5e's 16 MiB default scoped VMEM.
    budget = 12 * 1024 * 1024
    per_row = HD * (2 * itemsize + 12) * 2
    rows = max(8, (budget // per_row) // 8 * 8)     # multiple of 8
    return S if S <= rows else int(rows)


def apply_rotary_emb_pallas(x, cos_i, sin_m, sin_p, position_ids=None):
    """x: [B,S,H,D] or [B,S,D]; tables: [max_seq_len, D] (pair-interleaved)."""
    dtype = x.dtype
    orig_ndim = x.ndim
    if orig_ndim == 3:
        x = x[:, :, None, :]
    B, S, H, D = x.shape
    if D % 2 != 0:
        raise ValueError(f"head_dim ({D}) must be even")
    if cos_i.shape[-1] != D:
        raise ValueError("table last dim must equal head_dim")
    max_len = cos_i.shape[0]
    HD = H * D

    xf = x.reshape(B, S, HD)                        # free, contiguous reshape

    tS = _choose_seq_tile(S, HD, dtype.itemsize)
    nS = pl.cdiv(S, tS)

    x_spec = pl.BlockSpec((None, tS, HD), lambda s, b: (b, s, 0))

    if position_ids is None:
        if S > max_len:
            raise ValueError("seq_len exceeds precomputed freqs length")
        # [S, HD]: pair-interleaved table tiled over heads (tiny, built once per call).
        cos_t = jnp.tile(cos_i[:S], (1, H))
        sinm_t = jnp.tile(sin_m[:S], (1, H))
        sinp_t = jnp.tile(sin_p[:S], (1, H))
        # index_map ignores b -> block stays resident across the (inner) batch loop.
        t_spec = pl.BlockSpec((tS, HD), lambda s, b: (s, 0))
    else:
        if position_ids.shape != (B, S):
            raise ValueError(f"position_ids shape {position_ids.shape} must be ({B},{S})")
        # Best-effort bounds check (only when values are concrete).
        try:
            pmax, pmin = int(jnp.max(position_ids)), int(jnp.min(position_ids))
        except Exception:
            pmax = pmin = None
        if pmax is not None and (pmax >= max_len or pmin < 0):
            raise ValueError("position_ids out of range of precomputed tables")
        # TODO(synk): gather table rows in-kernel via scalar-prefetched position_ids
        # instead of materializing [B,S,H*D] tables in the wrapper.
        cos_t = jnp.tile(cos_i[position_ids], (1, 1, H))
        sinm_t = jnp.tile(sin_m[position_ids], (1, 1, H))
        sinp_t = jnp.tile(sin_p[position_ids], (1, 1, H))
        t_spec = pl.BlockSpec((None, tS, HD), lambda s, b: (b, s, 0))

    out = pl.pallas_call(
        _rope_kernel,
        out_shape=jax.ShapeDtypeStruct((B, S, HD), dtype),
        grid=(nS, B),                               # batch innermost: table blocks resident
        in_specs=[x_spec, t_spec, t_spec, t_spec],
        out_specs=x_spec,
        compiler_params=pltpu.CompilerParams(
            dimension_semantics=("parallel", "parallel")),
    )(xf, cos_t, sinm_t, sinp_t)

    out = out.reshape(B, S, H, D)
    if orig_ndim == 3:
        out = out[:, :, 0, :]
    return out


class RotaryEmbedding:
    """JAX/Pallas port of the PyTorch RotaryEmbedding module."""

    def __init__(self, dim: int, max_seq_len: int = 128, theta: float = 10000.0,
                 scaling_factor: float = 1.0, scaling_type: str = "linear"):
        if dim % 2 != 0:
            raise ValueError(f"dim ({dim}) must be even")
        self.dim = dim
        self.max_seq_len = max_seq_len
        self.theta = theta
        self.scaling_factor = scaling_factor
        # Accepted for API parity; the reference applies the same theta
        # rescaling regardless of scaling_type.
        self.scaling_type = scaling_type
        self.cos_i, self.sin_m, self.sin_p = precompute_rope_tables(
            dim, max_seq_len, theta, scaling_factor)

    def __call__(self, x, position_ids=None):
        return apply_rotary_emb_pallas(x, self.cos_i, self.sin_m, self.sin_p,
                                       position_ids)


# -----------------------------------------------------------------------------
# Pure-JAX reference (mirrors torch.view_as_complex semantics) for checking.
# -----------------------------------------------------------------------------
def _ref_tables(dim, max_seq_len, theta=10000.0, scaling_factor=1.0):
    theta = theta * (1.0 / scaling_factor) ** (dim / (dim - 2))
    freqs = 1.0 / theta ** (jnp.arange(0, dim, 2, dtype=jnp.float32) / dim)
    t = jnp.arange(max_seq_len, dtype=jnp.float32)
    ang = jnp.outer(t, freqs)
    return jnp.cos(ang), jnp.sin(ang)


def _rope_ref(x, cos_tab, sin_tab, position_ids=None):
    dtype = x.dtype
    orig_ndim = x.ndim
    if orig_ndim == 3:
        x = x[:, :, None, :]
    B, S, H, D = x.shape
    if position_ids is None:
        c = cos_tab[:S][None, :, None, :]
        s = sin_tab[:S][None, :, None, :]
    else:
        c = cos_tab[position_ids][:, :, None, :]
        s = sin_tab[position_ids][:, :, None, :]
    xf = x.astype(jnp.float32).reshape(B, S, H, D // 2, 2)
    xe, xo = xf[..., 0], xf[..., 1]
    oe = xe * c - xo * s
    oo = xe * s + xo * c
    out = jnp.stack([oe, oo], axis=-1).reshape(B, S, H, D)
    if orig_ndim == 3:
        out = out[:, :, 0, :]
    return out.astype(dtype)


if __name__ == "__main__":
    key = jax.random.PRNGKey(0)
    B, S, H, D = 2, 8, 4, 32
    max_seq_len = 128

    rope = RotaryEmbedding(dim=D, max_seq_len=max_seq_len)
    cos_ref, sin_ref = _ref_tables(D, max_seq_len)

    k1, k2 = jax.random.split(key)
    x = jax.random.normal(k1, (B, S, H, D), dtype=jnp.float32)

    # default sequential positions
    out = jax.block_until_ready(rope(x))
    ref = _rope_ref(x, cos_ref, sin_ref)
    np.testing.assert_allclose(np.asarray(out), np.asarray(ref),
                               rtol=1e-5, atol=1e-5)

    # explicit (shifted) position_ids
    position_ids = jnp.broadcast_to(jnp.arange(S)[None, :] + 3, (B, S))
    out_pid = jax.block_until_ready(rope(x, position_ids=position_ids))
    ref_pid = _rope_ref(x, cos_ref, sin_ref, position_ids)
    np.testing.assert_allclose(np.asarray(out_pid), np.asarray(ref_pid),
                               rtol=1e-5, atol=1e-5)

    # 3-D input path [B, S, D]
    x3 = jax.random.normal(k2, (B, S, D), dtype=jnp.float32)
    out3 = jax.block_until_ready(rope(x3))
    ref3 = _rope_ref(x3, cos_ref, sin_ref)
    np.testing.assert_allclose(np.asarray(out3), np.asarray(ref3),
                               rtol=1e-5, atol=1e-5)

    print("KERNEL_OK")
</pallas_src>

<mosaic_0001>
module attributes {stable_mosaic.version = 11 : i64} {
  func.func @_rope_kernel(%arg0: i32, %arg1: i32, %arg2: memref<1x8x128xf32, #tpu.memory_space<vmem>>, %arg3: memref<8x128xf32, #tpu.memory_space<vmem>>, %arg4: memref<8x128xf32, #tpu.memory_space<vmem>>, %arg5: memref<8x128xf32, #tpu.memory_space<vmem>>, %arg6: memref<1x8x128xf32, #tpu.memory_space<vmem>>) attributes {dimension_semantics = [#tpu.dimension_semantics<parallel>, #tpu.dimension_semantics<parallel>], iteration_bounds = array<i64: 1, 2>, scalar_prefetch = 0 : i64, scratch_operands = 0 : i64, tpu.core_type = #tpu.core_type<tc>, window_params = [{transform_indices = @transform_0, window_bounds = array<i64: 1, 8, 128>}, {transform_indices = @transform_1, window_bounds = array<i64: 8, 128>}, {transform_indices = @transform_2, window_bounds = array<i64: 8, 128>}, {transform_indices = @transform_3, window_bounds = array<i64: 8, 128>}, {transform_indices = @transform_4, window_bounds = array<i64: 1, 8, 128>}]} {
    %c0 = arith.constant 0 : index
    %c0_0 = arith.constant 0 : index
    %c0_1 = arith.constant 0 : index
    %0 = vector.load %arg2[%c0, %c0_0, %c0_1] : memref<1x8x128xf32, #tpu.memory_space<vmem>>, vector<1x8x128xf32>
    %1 = vector.shape_cast %0 : vector<1x8x128xf32> to vector<8x128xf32>
    %c127_i32 = arith.constant 127 : i32
    %2 = tpu.dynamic_rotate %1 by %c127_i32 dim 1 : vector<8x128xf32>, i32 -> vector<8x128xf32>
    %c1_i32 = arith.constant 1 : i32
    %3 = tpu.dynamic_rotate %1 by %c1_i32 dim 1 : vector<8x128xf32>, i32 -> vector<8x128xf32>
    %c0_2 = arith.constant 0 : index
    %c0_3 = arith.constant 0 : index
    %4 = vector.load %arg3[%c0_2, %c0_3] : memref<8x128xf32, #tpu.memory_space<vmem>>, vector<8x128xf32>
    %5 = arith.mulf %1, %4 : vector<8x128xf32>
    %c0_4 = arith.constant 0 : index
    %c0_5 = arith.constant 0 : index
    %6 = vector.load %arg4[%c0_4, %c0_5] : memref<8x128xf32, #tpu.memory_space<vmem>>, vector<8x128xf32>
    %7 = arith.mulf %2, %6 : vector<8x128xf32>
    %8 = arith.addf %5, %7 : vector<8x128xf32>
    %c0_6 = arith.constant 0 : index
    %c0_7 = arith.constant 0 : index
    %9 = vector.load %arg5[%c0_6, %c0_7] : memref<8x128xf32, #tpu.memory_space<vmem>>, vector<8x128xf32>
    %10 = arith.mulf %3, %9 : vector<8x128xf32>
    %11 = arith.addf %8, %10 : vector<8x128xf32>
    %c0_8 = arith.constant 0 : index
    %c0_9 = arith.constant 0 : index
    %c0_10 = arith.constant 0 : index
    %12 = vector.load %arg6[%c0_8, %c0_9, %c0_10] : memref<1x8x128xf32, #tpu.memory_space<vmem>>, vector<1x8x128xf32>
    %13 = vector.shape_cast %12 : vector<1x8x128xf32> to vector<8x128xf32>
    %14 = vector.shape_cast %11 : vector<8x128xf32> to vector<1x8x128xf32>
    tpu.vector_store %arg6[%c0_8, %c0_9, %c0_10], %14 {strides = array<i32>} : memref<1x8x128xf32, #tpu.memory_space<vmem>>, vector<1x8x128xf32>,
    return
  }
  func.func @transform_0(%arg0: i32, %arg1: i32) -> (i32, i32, i32) {
    %c0_i32 = arith.constant 0 : i32
    %c0_i32_0 = arith.constant 0 : i32
    return %arg1, %arg0, %c0_i32 : i32, i32, i32
  }
  func.func @transform_1(%arg0: i32, %arg1: i32) -> (i32, i32) {
    %c0_i32 = arith.constant 0 : i32
    %c0_i32_0 = arith.constant 0 : i32
    return %arg0, %c0_i32 : i32, i32
  }
  func.func @transform_2(%arg0: i32, %arg1: i32) -> (i32, i32) {
    %c0_i32 = arith.constant 0 : i32
    %c0_i32_0 = arith.constant 0 : i32
    return %arg0, %c0_i32 : i32, i32
  }
  func.func @transform_3(%arg0: i32, %arg1: i32) -> (i32, i32) {
    %c0_i32 = arith.constant 0 : i32
    %c0_i32_0 = arith.constant 0 : i32
    return %arg0, %c0_i32 : i32, i32
  }
  func.func @transform_4(%arg0: i32, %arg1: i32) -> (i32, i32, i32) {
    %c0_i32 = arith.constant 0 : i32
    %c0_i32_0 = arith.constant 0 : i32
    return %arg1, %arg0, %c0_i32 : i32, i32, i32
  }
}

</mosaic_0001>

<llo_original>
// kernel: tpu_custom_call.1
$region0: #{tpu_custom_call.1}
  #allocation0 [shape = 'u32[]', space=smem, size = 0x4, offset = 0x4, fixed_abs, tag = 'smem constant byte address 0x4 - core index']
  #allocation1 [shape = 'u32[144,128]{1,0:T(1,128)}', space=vmem, size = 0x12000, scoped, tag = 'internal scratch']
  %s0 = inlined_call_operand.hbm [shape: f32[2,8,128], index: 0, kind: input, shape index: {}]
  %s1 = inlined_call_operand.hbm [shape: f32[8,128], index: 1, kind: input, shape index: {}]
  %s2 = inlined_call_operand.hbm [shape: f32[8,128], index: 2, kind: input, shape index: {}]
  %s3 = inlined_call_operand.vmem [shape: f32[8,128], index: 3, kind: input, shape index: {}]
  %s4 = inlined_call_operand.hbm [shape: f32[2,8,128], index: 4, kind: output, shape index: {}]
  %s5 = sld [smem:[#allocation0]]
  $region61: #{tpu_custom_call.1} parent=0
    _
  %s7 = ssub.s32 1, %s5
  %s8 = scalar_select 0, %s7, %s5
  $region1: #{tpu_custom_call.1} parent=0
    #allocation2 [shape = 'u8[8192]{0}', space=vmem, size = 0x2000, scoped, tag = 'input window, operand 0']
    #allocation3 [shape = 's32[2]{0}', space=sflag, size = 0x8, scoped, tag = 'scoped memory for tpu_custom_call.1']
    #allocation4 [shape = 's32[2]{0}', space=sflag, size = 0x8, scoped, tag = 'scoped memory for tpu_custom_call.1']
    #allocation5 [shape = 'u8[4096]{0}', space=vmem, size = 0x1000, scoped, tag = 'input window, operand 1, single buffered']
    #allocation6 [shape = 's32[1]{0}', space=sflag, size = 0x4, scoped, tag = 'scoped memory for tpu_custom_call.1']
    #allocation7 [shape = 'u8[4096]{0}', space=vmem, size = 0x1000, scoped, tag = 'input window, operand 2, single buffered']
    #allocation8 [shape = 'u8[8192]{0}', space=vmem, size = 0x2000, scoped, tag = 'output window, operand 0']
    %9 = vsyncpa [#allocation3], 0
    %s10 = scalar_lea.sflag [#allocation3], 1
    %11 = vsyncpa %s10, 0
    %12 = vsyncpa [#allocation6], 0
    %13 = vsyncpa [#allocation4], 0
    %s14 = scalar_lea.sflag [#allocation4], 1
    %15 = vsyncpa %s14, 0
    loop: start=0, step=1, limit=4
    $region2: #{tpu_custom_call.1} parent=1 // loop_pre_header
      _
    $region3: #{tpu_custom_call.1} parent=1 // loop_header
      %s17 = sphi 0, %s21
      %p18 = scmp.ge.s32.totalorder %s17, 4
      %s24 = sphi 0, %s36
      %s25 = sphi 0, %s32
      %s26 = sphi 0, %s24
      %s27 = sphi 0, %s25
      %s28 = sphi 0, %s26
      %s29 = sphi 0, %s27
      %s41 = sphi 0, %s43
      %s44 = sphi 0, %s41
      %s45 = sphi 0, %s44
      %s61 = sphi 0, %s45
      %s67 = sphi 0, %s69
      %s70 = sphi 0, %s67
      %s71 = sphi 0, %s70
      %s87 = sphi 0, %s71
      %s93 = sphi 0, %s95
      %s96 = sphi 0, %s93
      %s97 = sphi 0, %s96
      %s113 = sphi 0, %s97
      %s119 = sphi 0, %s121
      %s122 = sphi 0, %s119
      %s123 = sphi 0, %s122
      %s139 = sphi 0, %s123
      %s147 = sphi 0, %s149
      %s150 = sphi 0, %s147
      %s151 = sphi 0, %s150
      %s167 = sphi 0, %s151
    $region4: #{tpu_custom_call.1} parent=1 // loop_header_branch
      %20 = sbr.rel (%p18) target = $region8
    $region5: #{tpu_custom_call.1} parent=1 // loop_body
      %s22 = ssub.s32 %s17, 1
      %s23 = ssub.s32 %s17, 2
      %s30 = sadd.s32 1, %s25
      %p31 = scmp.ge.s32.totalorder %s30, 2
      %s32 = scalar_select %p31, 0, %s30
      %s33 = sadd.s32 1, %s24
      %s34 = scalar_select %p31, %s33, %s24
      %p35 = scmp.ge.s32.totalorder %s34, 1
      %s36 = scalar_select %p35, 0, %s34
      %s37 = ssub.s32 %s25, %s32
      %s38 = ssub.s32 %s24, %s36
      %s39 = sor.u32 %s37, %s38
      %p40 = scmp.eq.s32.totalorder %s39, 0
      %s42 = sadd.s32 %s41, 1
      %s43 = scalar_select %p40, %s41, %s42
      %p46 = pneg %p40
      %p47 = scmp.eq.s32.totalorder %s17, 1
      %p48 = por %p46, %p47
      %p49 = scmp.ne.s32.totalorder %s41, %s44
      %p50 = scmp.eq.s32.totalorder %s17, 0
      %p51 = por %p49, %p50
      %p52 = scmp.ne.s32.totalorder %s41, %s44
      %p53 = scmp.eq.s32.totalorder %s22, 1
      %p54 = por %p52, %p53
      %p55 = scmp.ne.s32.totalorder %s44, %s45
      %p56 = scmp.eq.s32.totalorder %s22, 0
      %p57 = por %p55, %p56
      %p58 = scmp.ne.s32.totalorder %s44, %s45
      %p59 = scmp.eq.s32.totalorder %s23, 1
      %p60 = por %p58, %p59
      %p62 = scmp.ne.s32.totalorder %s45, %s61
      %p63 = scmp.eq.s32.totalorder %s23, 0
      %p64 = por %p62, %p63
      %s65 = ssub.s32 %s24, %s36
      %p66 = scmp.eq.s32.totalorder %s65, 0
      %s68 = sadd.s32 %s67, 1
      %s69 = scalar_select %p66, %s67, %s68
      %p72 = pneg %p66
      %p73 = scmp.eq.s32.totalorder %s17, 1
      %p74 = por %p72, %p73
      %p75 = scmp.ne.s32.totalorder %s67, %s70
      %p76 = scmp.eq.s32.totalorder %s17, 0
      %p77 = por %p75, %p76
      %p78 = scmp.ne.s32.totalorder %s67, %s70
      %p79 = scmp.eq.s32.totalorder %s22, 1
      %p80 = por %p78, %p79
      %p81 = scmp.ne.s32.totalorder %s70, %s71
      %p82 = scmp.eq.s32.totalorder %s22, 0
      %p83 = por %p81, %p82
      %p84 = scmp.ne.s32.totalorder %s70, %s71
      %p85 = scmp.eq.s32.totalorder %s23, 1
      %p86 = por %p84, %p85
      %p88 = scmp.ne.s32.totalorder %s71, %s87
      %p89 = scmp.eq.s32.totalorder %s23, 0
      %p90 = por %p88, %p89
      %s91 = ssub.s32 %s24, %s36
      %p92 = scmp.eq.s32.totalorder %s91, 0
      %s94 = sadd.s32 %s93, 1
      %s95 = scalar_select %p92, %s93, %s94
      %p98 = pneg %p92
      %p99 = scmp.eq.s32.totalorder %s17, 1
      %p100 = por %p98, %p99
      %p101 = scmp.ne.s32.totalorder %s93, %s96
      %p102 = scmp.eq.s32.totalorder %s17, 0
      %p103 = por %p101, %p102
      %p104 = scmp.ne.s32.totalorder %s93, %s96
      %p105 = scmp.eq.s32.totalorder %s22, 1
      %p106 = por %p104, %p105
      %p107 = scmp.ne.s32.totalorder %s96, %s97
      %p108 = scmp.eq.s32.totalorder %s22, 0
      %p109 = por %p107, %p108
      %p110 = scmp.ne.s32.totalorder %s96, %s97
      %p111 = scmp.eq.s32.totalorder %s23, 1
      %p112 = por %p110, %p111
      %p114 = scmp.ne.s32.totalorder %s97, %s113
      %p115 = scmp.eq.s32.totalorder %s23, 0
      %p116 = por %p114, %p115
      %s117 = ssub.s32 %s24, %s36
      %p118 = scmp.eq.s32.totalorder %s117, 0
      %s120 = sadd.s32 %s119, 1
      %s121 = scalar_select %p118, %s119, %s120
      %p124 = pneg %p118
      %p125 = scmp.eq.s32.totalorder %s17, 1
      %p126 = por %p124, %p125
      %p127 = scmp.ne.s32.totalorder %s119, %s122
      %p128 = scmp.eq.s32.totalorder %s17, 0
      %p129 = por %p127, %p128
      %p130 = scmp.ne.s32.totalorder %s119, %s122
      %p131 = scmp.eq.s32.totalorder %s22, 1
      %p132 = por %p130, %p131
      %p133 = scmp.ne.s32.totalorder %s122, %s123
      %p134 = scmp.eq.s32.totalorder %s22, 0
      %p135 = por %p133, %p134
      %p136 = scmp.ne.s32.totalorder %s122, %s123
      %p137 = scmp.eq.s32.totalorder %s23, 1
      %p138 = por %p136, %p137
      %p140 = scmp.ne.s32.totalorder %s123, %s139
      %p141 = scmp.eq.s32.totalorder %s23, 0
      %p142 = por %p140, %p141
      %s143 = ssub.s32 %s25, %s32
      %s144 = ssub.s32 %s24, %s36
      %s145 = sor.u32 %s143, %s144
      %p146 = scmp.eq.s32.totalorder %s145, 0
      %s148 = sadd.s32 %s147, 1
      %s149 = scalar_select %p146, %s147, %s148
      %p152 = pneg %p146
      %p153 = scmp.eq.s32.totalorder %s17, 1
      %p154 = por %p152, %p153
      %p155 = scmp.ne.s32.totalorder %s147, %s150
      %p156 = scmp.eq.s32.totalorder %s17, 0
      %p157 = por %p155, %p156
      %p158 = scmp.ne.s32.totalorder %s147, %s150
      %p159 = scmp.eq.s32.totalorder %s22, 1
      %p160 = por %p158, %p159
      %p161 = scmp.ne.s32.totalorder %s150, %s151
      %p162 = scmp.eq.s32.totalorder %s22, 0
      %p163 = por %p161, %p162
      %p164 = scmp.ne.s32.totalorder %s150, %s151
      %p165 = scmp.eq.s32.totalorder %s23, 1
      %p166 = por %p164, %p165
      %p168 = scmp.ne.s32.totalorder %s151, %s167
      %p169 = scmp.eq.s32.totalorder %s23, 0
      %p170 = por %p168, %p169
      %p171 = scmp.le.s32.totalorder 1, %s17
      %p172 = scmp.lt.s32.totalorder %s17, 3
      %p173 = pnand %p171, %p172
      %p174 = pneg %p173
      // Predicated region
      $region9: #{tpu_custom_call.1} parent=5 // pred_check
        _
      $region10: #{tpu_custom_call.1} parent=5 // pred_check_branch
        %176 = sbr.rel (%p173) target = $region12
      $region11: #{tpu_custom_call.1} parent=5 // pred_region
        %s177 = ssub.s32 %s17, 1
        // Predicated region
        $region13: #{tpu_custom_call.1} parent=11 // pred_check
          %p178 = pneg %p83
        $region14: #{tpu_custom_call.1} parent=11 // pred_check_branch
          %180 = sbr.rel (%p178) target = $region16
        $region15: #{tpu_custom_call.1} parent=11 // pred_region
          %s182 = ssub.s32 128, 128
          %183 = vsyncadd [#allocation6], %s182
          %s184 = smul.addr %s26, 128
          %s185 = scalar_lea.hbm %s1, %s184
          %s187 = sshll.u32 [#allocation5], 4
          %s188 = int_to_ptr.vmem [resolvable:$true] %s187
          %190 = dma.hbm_to_vmem [thread:$0]  %s185, 128, %s188, [#allocation6]
        $region16: #{tpu_custom_call.1} parent=11 // pred_fallthru
          _
        // Predicated region
        $region17: #{tpu_custom_call.1} parent=11 // pred_check
          %p191 = pneg %p109
        $region18: #{tpu_custom_call.1} parent=11 // pred_check_branch
          %193 = sbr.rel (%p191) target = $region20
        $region19: #{tpu_custom_call.1} parent=11 // pred_region
          %s195 = ssub.s32 128, 128
          %196 = vsyncadd [#allocation6], %s195
          %s197 = smul.addr %s26, 128
          %s198 = scalar_lea.hbm %s2, %s197
          %s200 = sshll.u32 [#allocation7], 4
          %s201 = int_to_ptr.vmem [resolvable:$true] %s200
          %203 = dma.hbm_to_vmem [thread:$0]  %s198, 128, %s201, [#allocation6]
        $region20: #{tpu_custom_call.1} parent=11 // pred_fallthru
          _
        // Predicated region
        $region21: #{tpu_custom_call.1} parent=11 // pred_check
          %p204 = pneg %p135
        $region22: #{tpu_custom_call.1} parent=11 // pred_check_branch
          %206 = sbr.rel (%p204) target = $region24
        $region23: #{tpu_custom_call.1} parent=11 // pred_region
          %p207 = scmp.lt.s32.totalorder %s26, 0
          %s208 = scalar_select %p207, %s26, 0
          %s209 = smul.addr %s208, 8
          %s210 = scalar_lea.vmem %s3, %s209
        $region24: #{tpu_custom_call.1} parent=11 // pred_fallthru
          _
      $region12: #{tpu_custom_call.1} parent=5 // pred_fallthru
        _
      %p211 = scmp.lt.s32.totalorder %s17, 2
      // Predicated region
      $region25: #{tpu_custom_call.1} parent=5 // pred_check
        %p212 = pneg %p211
      $region26: #{tpu_custom_call.1} parent=5 // pred_check_branch
        %214 = sbr.rel (%p212) target = $region28
      $region27: #{tpu_custom_call.1} parent=5 // pred_region
        // Predicated region
        $region29: #{tpu_custom_call.1} parent=27 // pred_check
          %p215 = pneg %p51
        $region30: #{tpu_custom_call.1} parent=27 // pred_check_branch
          %217 = sbr.rel (%p215) target = $region32
        $region31: #{tpu_custom_call.1} parent=27 // pred_region
          %s218 = sand.u32 %s41, 1
          %s219 = scalar_lea.sflag [#allocation3], %s218
          %s220 = sand.u32 %s41, 1
          %s221 = smul.addr %s220, 8
          %s222 = scalar_lea.vmem [#allocation2], %s221
          %s224 = ssub.s32 128, 128
          %225 = vsyncadd %s219, %s224
          %s226 = sadd.s32 %s24, %s25
          %s227 = smul.addr %s226, 128
          %s228 = scalar_lea.hbm %s0, %s227
          %s230 = sshll.u32 %s222, 4
          %s231 = int_to_ptr.vmem [resolvable:$true] %s230
          %233 = dma.hbm_to_vmem [thread:$0]  %s228, 128, %s231, %s219
        $region32: #{tpu_custom_call.1} parent=27 // pred_fallthru
          _
      $region28: #{tpu_custom_call.1} parent=5 // pred_fallthru
        _
      %p234 = scmp.le.s32.totalorder 1, %s17
      %p235 = scmp.lt.s32.totalorder %s17, 3
      %p236 = pnand %p234, %p235
      %p237 = pneg %p236
      // Predicated region
      $region33: #{tpu_custom_call.1} parent=5 // pred_check
        _
      $region34: #{tpu_custom_call.1} parent=5 // pred_check_branch
        %239 = sbr.rel (%p236) target = $region36
      $region35: #{tpu_custom_call.1} parent=5 // pred_region
        %s240 = ssub.s32 %s17, 1
        %s241 = sand.u32 %s44, 1
        %s242 = scalar_lea.sflag [#allocation3], %s241
        %s243 = sand.u32 %s44, 1
        %s244 = smul.addr %s243, 8
        %s245 = scalar_lea.vmem [#allocation2], %s244
        // Predicated region
        $region37: #{tpu_custom_call.1} parent=35 // pred_check
          %p246 = pneg %p57
        $region38: #{tpu_custom_call.1} parent=35 // pred_check_branch
          %248 = sbr.rel (%p246) target = $region40
        $region39: #{tpu_custom_call.1} parent=35 // pred_region
          %249 = dma.done %s242, 128
        $region40: #{tpu_custom_call.1} parent=35 // pred_fallthru
          _
        // Predicated region
        $region41: #{tpu_custom_call.1} parent=35 // pred_check
          %p250 = pneg %p83
        $region42: #{tpu_custom_call.1} parent=35 // pred_check_branch
          %252 = sbr.rel (%p250) target = $region44
        $region43: #{tpu_custom_call.1} parent=35 // pred_region
          %253 = dma.done [#allocation6], 128
        $region44: #{tpu_custom_call.1} parent=35 // pred_fallthru
          _
        // Predicated region
        $region45: #{tpu_custom_call.1} parent=35 // pred_check
          %p254 = pneg %p109
        $region46: #{tpu_custom_call.1} parent=35 // pred_check_branch
          %256 = sbr.rel (%p254) target = $region48
        $region47: #{tpu_custom_call.1} parent=35 // pred_region
          %257 = dma.done [#allocation6], 128
        $region48: #{tpu_custom_call.1} parent=35 // pred_fallthru
          _
        %s258 = sand.u32 %s44, 1
        %s259 = scalar_lea.sflag [#allocation3], %s258
        %s260 = sand.u32 %s44, 1
        %s261 = smul.addr %s260, 8
        %s262 = scalar_lea.vmem [#allocation2], %s261
        %p263 = pneg %p57
        %p264 = pneg %p54
        %p265 = pneg %p83
        %p266 = pneg %p80
        %p267 = pneg %p109
        %p268 = pneg %p106
        %p269 = scmp.lt.s32.totalorder %s26, 0
        %s270 = scalar_select %p269, %s26, 0
        %s271 = smul.addr %s270, 8
        %s272 = scalar_lea.vmem %s3, %s271
        %p273 = pneg %p135
        %p274 = pneg %p132
        %p275 = pneg %p163
        %p276 = pneg %p160
        %s277 = sand.u32 %s150, 1
        %s278 = scalar_lea.sflag [#allocation4], %s277
        %s279 = sand.u32 %s150, 1
        %s280 = smul.addr %s279, 8
        %s281 = scalar_lea.vmem [#allocation8], %s280
        %p282 = scmp.lt.s32.totalorder %s26, 0
        %s283 = scalar_select %p282, %s26, 0
        %s284 = smul.addr %s283, 8
        %s285 = scalar_lea.vmem %s3, %s284
        %v286 = vld [vmem:[%s245] sm:$0xff]
        %287 = vrot.lane.b32.xlu0 %v286, 127
        %v288 = vpop.permute.xlu0 %287
        %289 = vrot.lane.b32.xlu0 %v286, 1
        %v290 = vpop.permute.xlu0 %289
        %v291 = vld [vmem:[#allocation5] sm:$0xff]
        %v292 = vmul.f32 %v286, %v291
        %v293 = vld [vmem:[#allocation7] sm:$0xff]
        %v294 = vmul.f32 %v288, %v293
        %v295 = vadd.f32 %v292, %v294
        %v296 = vld [vmem:[%s285] sm:$0xff]
        %v297 = vmul.f32 %v290, %v296
        %v298 = vadd.f32 %v295, %v297
        %299 = vst [vmem:[%s281] sm:$0xff] %v298
        %s300 = sand.u32 %s150, 1
        %s301 = scalar_lea.sflag [#allocation4], %s300
        %s302 = sand.u32 %s150, 1
        %s303 = smul.addr %s302, 8
        %s304 = scalar_lea.vmem [#allocation8], %s303
        // Predicated region
        $region49: #{tpu_custom_call.1} parent=35 // pred_check
          %p305 = pneg %p160
        $region50: #{tpu_custom_call.1} parent=35 // pred_check_branch
          %307 = sbr.rel (%p305) target = $region52
        $region51: #{tpu_custom_call.1} parent=35 // pred_region
          %s309 = ssub.s32 128, 128
          %310 = vsyncadd %s301, %s309
          %s311 = sadd.s32 %s26, %s27
          %s312 = smul.addr %s311, 128
          %s313 = scalar_lea.hbm %s4, %s312
          %s315 = sshll.u32 %s304, 4
          %s316 = int_to_ptr.vmem [resolvable:$true] %s315
          %318 = dma.vmem_to_hbm [thread:$0]  %s316, 128, %s313, %s301
        $region52: #{tpu_custom_call.1} parent=35 // pred_fallthru
          _
      $region36: #{tpu_custom_call.1} parent=5 // pred_fallthru
        _
      %p319 = scmp.le.s32.totalorder 2, %s17
      // Predicated region
      $region53: #{tpu_custom_call.1} parent=5 // pred_check
        %p320 = pneg %p319
      $region54: #{tpu_custom_call.1} parent=5 // pred_check_branch
        %322 = sbr.rel (%p320) target = $region56
      $region55: #{tpu_custom_call.1} parent=5 // pred_region
        %s323 = ssub.s32 %s17, 2
        // Predicated region
        $region57: #{tpu_custom_call.1} parent=55 // pred_check
          %p324 = pneg %p166
        $region58: #{tpu_custom_call.1} parent=55 // pred_check_branch
          %326 = sbr.rel (%p324) target = $region60
        $region59: #{tpu_custom_call.1} parent=55 // pred_region
          %s327 = sand.u32 %s151, 1
          %s328 = scalar_lea.sflag [#allocation4], %s327
          %s329 = sand.u32 %s151, 1
          %s330 = smul.addr %s329, 8
          %s331 = scalar_lea.vmem [#allocation8], %s330
          %332 = dma.done %s328, 128
        $region60: #{tpu_custom_call.1} parent=55 // pred_fallthru
          _
      $region56: #{tpu_custom_call.1} parent=5 // pred_fallthru
        _
    $region6: #{tpu_custom_call.1} parent=1 // loop_footer
      %s21 = sadd.s32 1, %s17
    $region7: #{tpu_custom_call.1} parent=1 // loop_footer_branch
      %16 = sbr.rel target = $region3
    $region8: #{tpu_custom_call.1} parent=1 // loop_exit
      _
    %333 = vsyncpa [#allocation3], 1
    %s334 = scalar_lea.sflag [#allocation3], 1
    %335 = vsyncpa %s334, 1
    %336 = vsyncpa [#allocation6], 1
    %337 = vsyncpa [#allocation4], 1
    %s338 = scalar_lea.sflag [#allocation4], 1
    %339 = vsyncpa %s338, 1

</llo_original>
